<compile_context>
chip_gen: v7x
topology: tpu7x:2x2x1
jax: 0.10.0
libtpu: 0.0.40
codegen_flags: <defaults>
</compile_context>

<pallas_src>
import jax
import jax.numpy as jnp
from jax.experimental import pallas as pl
from jax.experimental.pallas import tpu as pltpu


def _interaction_kernel(x1_ref, x2_ref, w1_ref, w2_ref, b_ref, o_ref):
    # x1_ref / x2_ref / o_ref: (C, TS) spatial-on-lanes tile of one sample.
    # w1_ref / w2_ref: (C, C) resident f32 weights; b_ref: (C, 1) resident f32 bias.
    x1 = x1_ref[...]
    x2 = x2_ref[...]
    # 1x1 conv == per-pixel channel matmul; accumulate in f32 on the MXU.
    logits = (
        jnp.dot(w1_ref[...], x1, preferred_element_type=jnp.float32)
        + jnp.dot(w2_ref[...], x2, preferred_element_type=jnp.float32)
        + b_ref[...]                      # (C, 1) broadcast across lanes
    )
    # sigmoid(x) = 0.5 * tanh(x/2) + 0.5 : a single EUP transcendental instead
    # of exp + full-precision divide (keeps the VALU free once bf16 I/O halves
    # the DMA time per tile).
    mask = 0.5 * jnp.tanh(0.5 * logits) + 0.5
    out = x1.astype(jnp.float32) + x2.astype(jnp.float32) * mask
    o_ref[...] = out.astype(o_ref.dtype)


def interaction_forward(x1_nchw, x2_nchw, weight, bias, *, ts=2048, alias_x1=False):
    """InteractionModule forward.

    x1_nchw, x2_nchw: (N, C, H, W) float inputs (bf16 recommended: the kernel
                      is HBM-bound at small C, so bf16 I/O is ~2x end-to-end).
    weight: (C, 2C, 1, 1) conv weight.  bias: (C,).
    Returns an array with the same shape/dtype as x1_nchw.
    """
    N, C, H, W = x1_nchw.shape
    S = H * W
    out_dtype = x1_nchw.dtype

    # Free reshapes (contiguous NCHW) — no transposes, no extra HBM traffic.
    x1 = x1_nchw.reshape(N, C, S)
    x2 = x2_nchw.reshape(N, C, S)

    # Lane-dense output: if the spatial extent is below one vreg lane width,
    # pad it to 128 so stores are full `vst`, not masked `vst.msk`.
    if S < 128:
        x1 = jnp.pad(x1, ((0, 0), (0, 0), (0, 128 - S)))
        x2 = jnp.pad(x2, ((0, 0), (0, 0), (0, 128 - S)))
        s_pad = 128
    else:
        s_pad = S

    # Split the 1x1-conv weight: logits[:, s] = W1 @ x1[:, s] + W2 @ x2[:, s] + b.
    # Weights/bias are tiny and stay resident in VMEM, kept in f32 for accuracy.
    w = weight[:, :, 0, 0].astype(jnp.float32)      # (C_out=C, C_in=2C)
    w1 = w[:, :C]                                   # (C, C) acts on x1
    w2 = w[:, C:]                                   # (C, C) acts on x2
    b = bias.astype(jnp.float32).reshape(C, 1)

    # Spatial tile on lanes.  >=512 lanes is already ~85% of HBM roofline, so
    # 2048 is plenty; clamp user overrides to keep 3 streams x 2 buffers of
    # VMEM safely under v5e's 16 MiB / v7x's 32 MiB default scoped limits.
    ts = min(ts, 8192)
    ts_eff = min(ts, s_pad)
    if s_pad > 128:
        ts_eff = max(128, (ts_eff // 128) * 128)

    # v7x has 2 TensorCores per chip: guarantee >= 2 parallel grid steps when
    # possible so neither core idles (no-op on single-core v5e/v6e).
    if N * pl.cdiv(s_pad, ts_eff) < 2 and s_pad >= 256:
        half = ((pl.cdiv(s_pad, 2) + 127) // 128) * 128
        if half < s_pad:
            ts_eff = half

    grid = (N, pl.cdiv(s_pad, ts_eff))

    # Advisory cost estimate (real element size for bytes_accessed).
    elem = jnp.dtype(out_dtype).itemsize
    cost = pl.CostEstimate(
        flops=4 * N * s_pad * C * C,                    # two (C,C)x(C,S) matmuls
        transcendentals=N * s_pad * C,                  # sigmoid (tanh)
        bytes_accessed=elem * 3 * N * C * s_pad + 4 * (2 * C * C + C),
    )

    out = pl.pallas_call(
        _interaction_kernel,
        out_shape=jax.ShapeDtypeStruct((N, C, s_pad), out_dtype),
        grid_spec=pltpu.PrefetchScalarGridSpec(
            num_scalar_prefetch=0,
            grid=grid,
            in_specs=[
                pl.BlockSpec((None, C, ts_eff), lambda n, s: (n, 0, s)),  # x1
                pl.BlockSpec((None, C, ts_eff), lambda n, s: (n, 0, s)),  # x2
                pl.BlockSpec((C, C), lambda n, s: (0, 0)),                # W1
                pl.BlockSpec((C, C), lambda n, s: (0, 0)),                # W2
                pl.BlockSpec((C, 1), lambda n, s: (0, 0)),                # bias
            ],
            out_specs=pl.BlockSpec((None, C, ts_eff), lambda n, s: (n, 0, s)),
        ),
        compiler_params=pltpu.CompilerParams(
            dimension_semantics=("parallel", "parallel"),
        ),
        cost_estimate=cost,
        # Each output block is written exactly once with the same index map as
        # x1, so the output may reuse x1's HBM buffer when x1 is dead after
        # the call (saves one output allocation; no bandwidth change).
        input_output_aliases={0: 0} if alias_x1 else {},
    )(x1, x2, w1, w2, b)

    if s_pad != S:
        out = out[:, :, :S]
    return out.reshape(N, C, H, W)


def reference_forward(x1, x2, weight, bias):
    """Plain-JAX reference matching the PyTorch module (NCHW)."""
    inp = jnp.concatenate((x1, x2), axis=1)                 # (N, 2C, H, W)
    w = weight[:, :, 0, 0]                                  # (C, 2C)
    logits = jnp.einsum("nchw,oc->nohw", inp, w) + bias[None, :, None, None]
    mask = jax.nn.sigmoid(logits)
    return x1 + x2 * mask


if __name__ == "__main__":
    num_channels = 32
    N, H, W = 2, 16, 16

    key = jax.random.PRNGKey(0)
    k1, k2, kw, kb = jax.random.split(key, 4)

    x1 = jax.random.normal(k1, (N, num_channels, H, W), dtype=jnp.float32)
    x2 = jax.random.normal(k2, (N, num_channels, H, W), dtype=jnp.float32)

    # Conv2d(2C -> C, 1x1) default init: uniform(-bound, bound),
    # bound = 1/sqrt(fan_in), fan_in = 2C.
    fan_in = 2 * num_channels
    bound = 1.0 / (fan_in ** 0.5)
    weight = jax.random.uniform(
        kw, (num_channels, 2 * num_channels, 1, 1),
        minval=-bound, maxval=bound, dtype=jnp.float32)
    bias = jax.random.uniform(
        kb, (num_channels,), minval=-bound, maxval=bound, dtype=jnp.float32)

    # --- f32 I/O: tight check against the reference. ---
    out = jax.block_until_ready(interaction_forward(x1, x2, weight, bias))
    ref = reference_forward(x1, x2, weight, bias)
    assert out.shape == (N, num_channels, H, W)
    assert jnp.allclose(out, ref, atol=1e-5, rtol=1e-5), "f32 mismatch vs reference"

    # --- bf16 HBM I/O (the ~2x lever for this HBM-bound kernel), f32 math inside. ---
    x1_bf = x1.astype(jnp.bfloat16)
    x2_bf = x2.astype(jnp.bfloat16)
    ref_bf = reference_forward(x1_bf.astype(jnp.float32),
                               x2_bf.astype(jnp.float32), weight, bias)
    out_bf = jax.block_until_ready(
        interaction_forward(x1_bf, x2_bf, weight, bias, alias_x1=True))
    assert out_bf.dtype == jnp.bfloat16
    assert jnp.allclose(out_bf.astype(jnp.float32), ref_bf, atol=5e-2, rtol=5e-2), \
        "bf16 mismatch vs reference"

    # --- Small feature map (S < 128): lane-padded path. ---
    x1_s = x1[:, :, :7, :7]
    x2_s = x2[:, :, :7, :7]
    out_s = jax.block_until_ready(interaction_forward(x1_s, x2_s, weight, bias))
    ref_s = reference_forward(x1_s, x2_s, weight, bias)
    assert jnp.allclose(out_s, ref_s, atol=1e-5, rtol=1e-5), "small-S mismatch vs reference"

    print("KERNEL_OK")
</pallas_src>

<mosaic_0001>
module attributes {stable_mosaic.version = 11 : i64} {
  func.func @_interaction_kernel(%arg0: i32, %arg1: i32, %arg2: memref<1x32x256xf32, #tpu.memory_space<vmem>>, %arg3: memref<1x32x256xf32, #tpu.memory_space<vmem>>, %arg4: memref<32x32xf32, #tpu.memory_space<vmem>>, %arg5: memref<32x32xf32, #tpu.memory_space<vmem>>, %arg6: memref<32x1xf32, #tpu.memory_space<vmem>>, %arg7: memref<1x32x256xf32, #tpu.memory_space<vmem>>) attributes {dimension_semantics = [#tpu.dimension_semantics<parallel>, #tpu.dimension_semantics<parallel>], iteration_bounds = array<i64: 2, 1>, scalar_prefetch = 0 : i64, scratch_operands = 0 : i64, tpu.core_type = #tpu.core_type<tc>, window_params = [{transform_indices = @transform_0, window_bounds = array<i64: 1, 32, 256>}, {transform_indices = @transform_1, window_bounds = array<i64: 1, 32, 256>}, {pipeline_mode = #tpu.pipeline_mode<synchronous>, transform_indices = @transform_2, window_bounds = array<i64: 32, 32>}, {pipeline_mode = #tpu.pipeline_mode<synchronous>, transform_indices = @transform_3, window_bounds = array<i64: 32, 32>}, {pipeline_mode = #tpu.pipeline_mode<synchronous>, transform_indices = @transform_4, window_bounds = array<i64: 32, 1>}, {transform_indices = @transform_5, window_bounds = array<i64: 1, 32, 256>}]} {
    %c0 = arith.constant 0 : index
    %c0_0 = arith.constant 0 : index
    %c0_1 = arith.constant 0 : index
    %0 = vector.load %arg2[%c0, %c0_0, %c0_1] : memref<1x32x256xf32, #tpu.memory_space<vmem>>, vector<1x32x256xf32>
    %1 = vector.shape_cast %0 : vector<1x32x256xf32> to vector<32x256xf32>
    %c0_2 = arith.constant 0 : index
    %c0_3 = arith.constant 0 : index
    %c0_4 = arith.constant 0 : index
    %2 = vector.load %arg3[%c0_2, %c0_3, %c0_4] : memref<1x32x256xf32, #tpu.memory_space<vmem>>, vector<1x32x256xf32>
    %3 = vector.shape_cast %2 : vector<1x32x256xf32> to vector<32x256xf32>
    %c0_5 = arith.constant 0 : index
    %c0_6 = arith.constant 0 : index
    %4 = vector.load %arg4[%c0_5, %c0_6] : memref<32x32xf32, #tpu.memory_space<vmem>>, vector<32x32xf32>
    %cst = arith.constant dense<0.000000e+00> : vector<32x256xf32>
    %5 = tpu.matmul %4, %1, %cst {dimension_numbers = #tpu.dot_dimension_numbers<[1], [0], [0], [1], [0, 0, 1, 1], [], []>} : vector<32x32xf32>, vector<32x256xf32>, vector<32x256xf32> -> vector<32x256xf32>
    %c0_7 = arith.constant 0 : index
    %c0_8 = arith.constant 0 : index
    %6 = vector.load %arg5[%c0_7, %c0_8] : memref<32x32xf32, #tpu.memory_space<vmem>>, vector<32x32xf32>
    %cst_9 = arith.constant dense<0.000000e+00> : vector<32x256xf32>
    %7 = tpu.matmul %6, %3, %cst_9 {dimension_numbers = #tpu.dot_dimension_numbers<[1], [0], [0], [1], [0, 0, 1, 1], [], []>} : vector<32x32xf32>, vector<32x256xf32>, vector<32x256xf32> -> vector<32x256xf32>
    %8 = arith.addf %5, %7 : vector<32x256xf32>
    %c0_10 = arith.constant 0 : index
    %c0_11 = arith.constant 0 : index
    %9 = vector.load %arg6[%c0_10, %c0_11] : memref<32x1xf32, #tpu.memory_space<vmem>>, vector<32x1xf32>
    %10 = vector.broadcast %9 : vector<32x1xf32> to vector<32x256xf32>
    %11 = arith.addf %8, %10 : vector<32x256xf32>
    %cst_12 = arith.constant 5.000000e-01 : f32
    %12 = vector.broadcast %cst_12 : f32 to vector<32x256xf32>
    %13 = arith.mulf %12, %11 : vector<32x256xf32>
    %14 = math.tanh %13 : vector<32x256xf32>
    %cst_13 = arith.constant 5.000000e-01 : f32
    %15 = vector.broadcast %cst_13 : f32 to vector<32x256xf32>
    %16 = arith.mulf %15, %14 : vector<32x256xf32>
    %cst_14 = arith.constant 5.000000e-01 : f32
    %17 = vector.broadcast %cst_14 : f32 to vector<32x256xf32>
    %18 = arith.addf %16, %17 : vector<32x256xf32>
    %19 = arith.mulf %3, %18 : vector<32x256xf32>
    %20 = arith.addf %1, %19 : vector<32x256xf32>
    %c0_15 = arith.constant 0 : index
    %c0_16 = arith.constant 0 : index
    %c0_17 = arith.constant 0 : index
    %21 = vector.load %arg7[%c0_15, %c0_16, %c0_17] : memref<1x32x256xf32, #tpu.memory_space<vmem>>, vector<1x32x256xf32>
    %22 = vector.shape_cast %21 : vector<1x32x256xf32> to vector<32x256xf32>
    %23 = vector.shape_cast %20 : vector<32x256xf32> to vector<1x32x256xf32>
    tpu.vector_store %arg7[%c0_15, %c0_16, %c0_17], %23 {strides = array<i32>} : memref<1x32x256xf32, #tpu.memory_space<vmem>>, vector<1x32x256xf32>,
    return
  }
  func.func @transform_0(%arg0: i32, %arg1: i32) -> (i32, i32, i32) {
    %c0_i32 = arith.constant 0 : i32
    %c0_i32_0 = arith.constant 0 : i32
    return %arg0, %c0_i32, %arg1 : i32, i32, i32
  }
  func.func @transform_1(%arg0: i32, %arg1: i32) -> (i32, i32, i32) {
    %c0_i32 = arith.constant 0 : i32
    %c0_i32_0 = arith.constant 0 : i32
    return %arg0, %c0_i32, %arg1 : i32, i32, i32
  }
  func.func @transform_2(%arg0: i32, %arg1: i32) -> (i32, i32) {
    %c0_i32 = arith.constant 0 : i32
    %c0_i32_0 = arith.constant 0 : i32
    %c0_i32_1 = arith.constant 0 : i32
    return %c0_i32, %c0_i32_0 : i32, i32
  }
  func.func @transform_3(%arg0: i32, %arg1: i32) -> (i32, i32) {
    %c0_i32 = arith.constant 0 : i32
    %c0_i32_0 = arith.constant 0 : i32
    %c0_i32_1 = arith.constant 0 : i32
    return %c0_i32, %c0_i32_0 : i32, i32
  }
  func.func @transform_4(%arg0: i32, %arg1: i32) -> (i32, i32) {
    %c0_i32 = arith.constant 0 : i32
    %c0_i32_0 = arith.constant 0 : i32
    %c0_i32_1 = arith.constant 0 : i32
    return %c0_i32, %c0_i32_0 : i32, i32
  }
  func.func @transform_5(%arg0: i32, %arg1: i32) -> (i32, i32, i32) {
    %c0_i32 = arith.constant 0 : i32
    %c0_i32_0 = arith.constant 0 : i32
    return %arg0, %c0_i32, %arg1 : i32, i32, i32
  }
}

</mosaic_0001>

<llo_original>
// kernel: tpu_custom_call.1
$region0: #{tpu_custom_call.1}
  #allocation0 [shape = 'u32[]', space=smem, size = 0x4, offset = 0x4, fixed_abs, tag = 'smem constant byte address 0x4 - core index']
  #allocation1 [shape = 'u32[144,128]{1,0:T(1,128)}', space=vmem, size = 0x12000, scoped, tag = 'internal scratch']
  %s0 = inlined_call_operand.hbm [shape: f32[2,32,256], index: 0, kind: input, shape index: {}]
  %s1 = inlined_call_operand.hbm [shape: f32[2,32,256], index: 1, kind: input, shape index: {}]
  %s2 = inlined_call_operand.vmem [shape: f32[32,32], index: 2, kind: input, shape index: {}]
  %s3 = inlined_call_operand.hbm [shape: f32[32,32], index: 3, kind: input, shape index: {}]
  %s4 = inlined_call_operand.vmem [shape: f32[32,1], index: 4, kind: input, shape index: {}]
  %s5 = inlined_call_operand.hbm [shape: f32[2,32,256], index: 5, kind: output, shape index: {}]
  %s6 = sld [smem:[#allocation0]]
  $region65: #{tpu_custom_call.1} parent=0
    _
  %s8 = ssub.s32 1, %s6
  %s9 = scalar_select 0, %s8, %s6
  $region1: #{tpu_custom_call.1} parent=0
    #allocation2 [shape = 'u8[65536]{0}', space=vmem, size = 0x10000, scoped, tag = 'input window, operand 0']
    #allocation3 [shape = 's32[2]{0}', space=sflag, size = 0x8, scoped, tag = 'scoped memory for tpu_custom_call.1']
    #allocation4 [shape = 's32[2]{0}', space=sflag, size = 0x8, scoped, tag = 'scoped memory for tpu_custom_call.1']
    #allocation5 [shape = 'u8[65536]{0}', space=vmem, size = 0x10000, scoped, tag = 'input window, operand 1']
    #allocation6 [shape = 's32[2]{0}', space=sflag, size = 0x8, scoped, tag = 'scoped memory for tpu_custom_call.1']
    #allocation7 [shape = 'u8[16384]{0}', space=vmem, size = 0x4000, scoped, tag = 'input window, operand 3, single buffered']
    #allocation8 [shape = 'u8[65536]{0}', space=vmem, size = 0x10000, scoped, tag = 'output window, operand 0']
    %10 = vsyncpa [#allocation3], 0
    %s11 = scalar_lea.sflag [#allocation3], 1
    %12 = vsyncpa %s11, 0
    %13 = vsyncpa [#allocation6], 0
    %s14 = scalar_lea.sflag [#allocation6], 1
    %15 = vsyncpa %s14, 0
    %16 = vsyncpa [#allocation4], 0
    %s17 = scalar_lea.sflag [#allocation4], 1
    %18 = vsyncpa %s17, 0
    loop: start=0, step=1, limit=4
    $region2: #{tpu_custom_call.1} parent=1 // loop_pre_header
      _
    $region3: #{tpu_custom_call.1} parent=1 // loop_header
      %s20 = sphi 0, %s24
      %p21 = scmp.ge.s32.totalorder %s20, 4
      %s27 = sphi 0, %s39
      %s28 = sphi 0, %s35
      %s29 = sphi 0, %s27
      %s30 = sphi 0, %s28
      %s31 = sphi 0, %s29
      %s32 = sphi 0, %s30
      %s44 = sphi 0, %s46
      %s47 = sphi 0, %s44
      %s48 = sphi 0, %s47
      %s64 = sphi 0, %s48
      %s72 = sphi 0, %s74
      %s75 = sphi 0, %s72
      %s76 = sphi 0, %s75
      %s92 = sphi 0, %s76
      %s96 = sphi 0, %s96
      %s98 = sphi 0, %s96
      %s99 = sphi 0, %s98
      %s113 = sphi 0, %s99
      %s117 = sphi 0, %s117
      %s119 = sphi 0, %s117
      %s120 = sphi 0, %s119
      %s134 = sphi 0, %s120
      %s138 = sphi 0, %s138
      %s140 = sphi 0, %s138
      %s141 = sphi 0, %s140
      %s155 = sphi 0, %s141
      %s163 = sphi 0, %s165
      %s166 = sphi 0, %s163
      %s167 = sphi 0, %s166
      %s183 = sphi 0, %s167
    $region4: #{tpu_custom_call.1} parent=1 // loop_header_branch
      %23 = sbr.rel (%p21) target = $region8
    $region5: #{tpu_custom_call.1} parent=1 // loop_body
      %s25 = ssub.s32 %s20, 1
      %s26 = ssub.s32 %s20, 2
      %s33 = sadd.s32 1, %s28
      %p34 = scmp.ge.s32.totalorder %s33, 1
      %s35 = scalar_select %p34, 0, %s33
      %s36 = sadd.s32 1, %s27
      %s37 = scalar_select %p34, %s36, %s27
      %p38 = scmp.ge.s32.totalorder %s37, 2
      %s39 = scalar_select %p38, 0, %s37
      %s40 = ssub.s32 %s27, %s39
      %s41 = ssub.s32 %s28, %s35
      %s42 = sor.u32 %s40, %s41
      %p43 = scmp.eq.s32.totalorder %s42, 0
      %s45 = sadd.s32 %s44, 1
      %s46 = scalar_select %p43, %s44, %s45
      %p49 = pneg %p43
      %p50 = scmp.eq.s32.totalorder %s20, 1
      %p51 = por %p49, %p50
      %p52 = scmp.ne.s32.totalorder %s44, %s47
      %p53 = scmp.eq.s32.totalorder %s20, 0
      %p54 = por %p52, %p53
      %p55 = scmp.ne.s32.totalorder %s44, %s47
      %p56 = scmp.eq.s32.totalorder %s25, 1
      %p57 = por %p55, %p56
      %p58 = scmp.ne.s32.totalorder %s47, %s48
      %p59 = scmp.eq.s32.totalorder %s25, 0
      %p60 = por %p58, %p59
      %p61 = scmp.ne.s32.totalorder %s47, %s48
      %p62 = scmp.eq.s32.totalorder %s26, 1
      %p63 = por %p61, %p62
      %p65 = scmp.ne.s32.totalorder %s48, %s64
      %p66 = scmp.eq.s32.totalorder %s26, 0
      %p67 = por %p65, %p66
      %s68 = ssub.s32 %s27, %s39
      %s69 = ssub.s32 %s28, %s35
      %s70 = sor.u32 %s68, %s69
      %p71 = scmp.eq.s32.totalorder %s70, 0
      %s73 = sadd.s32 %s72, 1
      %s74 = scalar_select %p71, %s72, %s73
      %p77 = pneg %p71
      %p78 = scmp.eq.s32.totalorder %s20, 1
      %p79 = por %p77, %p78
      %p80 = scmp.ne.s32.totalorder %s72, %s75
      %p81 = scmp.eq.s32.totalorder %s20, 0
      %p82 = por %p80, %p81
      %p83 = scmp.ne.s32.totalorder %s72, %s75
      %p84 = scmp.eq.s32.totalorder %s25, 1
      %p85 = por %p83, %p84
      %p86 = scmp.ne.s32.totalorder %s75, %s76
      %p87 = scmp.eq.s32.totalorder %s25, 0
      %p88 = por %p86, %p87
      %p89 = scmp.ne.s32.totalorder %s75, %s76
      %p90 = scmp.eq.s32.totalorder %s26, 1
      %p91 = por %p89, %p90
      %p93 = scmp.ne.s32.totalorder %s76, %s92
      %p94 = scmp.eq.s32.totalorder %s26, 0
      %p95 = por %p93, %p94
      %s97 = sadd.s32 %s96, 1
      %p100 = scmp.eq.s32.totalorder %s20, 1
      %p101 = scmp.ne.s32.totalorder %s96, %s98
      %p102 = scmp.eq.s32.totalorder %s20, 0
      %p103 = por %p101, %p102
      %p104 = scmp.ne.s32.totalorder %s96, %s98
      %p105 = scmp.eq.s32.totalorder %s25, 1
      %p106 = por %p104, %p105
      %p107 = scmp.ne.s32.totalorder %s98, %s99
      %p108 = scmp.eq.s32.totalorder %s25, 0
      %p109 = por %p107, %p108
      %p110 = scmp.ne.s32.totalorder %s98, %s99
      %p111 = scmp.eq.s32.totalorder %s26, 1
      %p112 = por %p110, %p111
      %p114 = scmp.ne.s32.totalorder %s99, %s113
      %p115 = scmp.eq.s32.totalorder %s26, 0
      %p116 = por %p114, %p115
      %s118 = sadd.s32 %s117, 1
      %p121 = scmp.eq.s32.totalorder %s20, 1
      %p122 = scmp.ne.s32.totalorder %s117, %s119
      %p123 = scmp.eq.s32.totalorder %s20, 0
      %p124 = por %p122, %p123
      %p125 = scmp.ne.s32.totalorder %s117, %s119
      %p126 = scmp.eq.s32.totalorder %s25, 1
      %p127 = por %p125, %p126
      %p128 = scmp.ne.s32.totalorder %s119, %s120
      %p129 = scmp.eq.s32.totalorder %s25, 0
      %p130 = por %p128, %p129
      %p131 = scmp.ne.s32.totalorder %s119, %s120
      %p132 = scmp.eq.s32.totalorder %s26, 1
      %p133 = por %p131, %p132
      %p135 = scmp.ne.s32.totalorder %s120, %s134
      %p136 = scmp.eq.s32.totalorder %s26, 0
      %p137 = por %p135, %p136
      %s139 = sadd.s32 %s138, 1
      %p142 = scmp.eq.s32.totalorder %s20, 1
      %p143 = scmp.ne.s32.totalorder %s138, %s140
      %p144 = scmp.eq.s32.totalorder %s20, 0
      %p145 = por %p143, %p144
      %p146 = scmp.ne.s32.totalorder %s138, %s140
      %p147 = scmp.eq.s32.totalorder %s25, 1
      %p148 = por %p146, %p147
      %p149 = scmp.ne.s32.totalorder %s140, %s141
      %p150 = scmp.eq.s32.totalorder %s25, 0
      %p151 = por %p149, %p150
      %p152 = scmp.ne.s32.totalorder %s140, %s141
      %p153 = scmp.eq.s32.totalorder %s26, 1
      %p154 = por %p152, %p153
      %p156 = scmp.ne.s32.totalorder %s141, %s155
      %p157 = scmp.eq.s32.totalorder %s26, 0
      %p158 = por %p156, %p157
      %s159 = ssub.s32 %s27, %s39
      %s160 = ssub.s32 %s28, %s35
      %s161 = sor.u32 %s159, %s160
      %p162 = scmp.eq.s32.totalorder %s161, 0
      %s164 = sadd.s32 %s163, 1
      %s165 = scalar_select %p162, %s163, %s164
      %p168 = pneg %p162
      %p169 = scmp.eq.s32.totalorder %s20, 1
      %p170 = por %p168, %p169
      %p171 = scmp.ne.s32.totalorder %s163, %s166
      %p172 = scmp.eq.s32.totalorder %s20, 0
      %p173 = por %p171, %p172
      %p174 = scmp.ne.s32.totalorder %s163, %s166
      %p175 = scmp.eq.s32.totalorder %s25, 1
      %p176 = por %p174, %p175
      %p177 = scmp.ne.s32.totalorder %s166, %s167
      %p178 = scmp.eq.s32.totalorder %s25, 0
      %p179 = por %p177, %p178
      %p180 = scmp.ne.s32.totalorder %s166, %s167
      %p181 = scmp.eq.s32.totalorder %s26, 1
      %p182 = por %p180, %p181
      %p184 = scmp.ne.s32.totalorder %s167, %s183
      %p185 = scmp.eq.s32.totalorder %s26, 0
      %p186 = por %p184, %p185
      %p187 = scmp.le.s32.totalorder 1, %s20
      %p188 = scmp.lt.s32.totalorder %s20, 3
      %p189 = pnand %p187, %p188
      %p190 = pneg %p189
      // Predicated region
      $region9: #{tpu_custom_call.1} parent=5 // pred_check
        _
      $region10: #{tpu_custom_call.1} parent=5 // pred_check_branch
        %192 = sbr.rel (%p189) target = $region12
      $region11: #{tpu_custom_call.1} parent=5 // pred_region
        %s193 = ssub.s32 %s20, 1
        // Predicated region
        $region13: #{tpu_custom_call.1} parent=11 // pred_check
          %p194 = pneg %p109
        $region14: #{tpu_custom_call.1} parent=11 // pred_check_branch
          %196 = sbr.rel (%p194) target = $region16
        $region15: #{tpu_custom_call.1} parent=11 // pred_region
          _
        $region16: #{tpu_custom_call.1} parent=11 // pred_fallthru
          _
        // Predicated region
        $region17: #{tpu_custom_call.1} parent=11 // pred_check
          %p197 = pneg %p130
        $region18: #{tpu_custom_call.1} parent=11 // pred_check_branch
          %199 = sbr.rel (%p197) target = $region20
        $region19: #{tpu_custom_call.1} parent=11 // pred_region
          %s201 = ssub.s32 512, 512
          %202 = vsyncadd [#allocation6], %s201
          %s203 = sshll.u32 [#allocation7], 4
          %s204 = int_to_ptr.vmem [resolvable:$true] %s203
          %209 = dma.hbm_to_vmem [thread:$0]  %s3, 512, %s204, [#allocation6], 128, 128, 8
        $region20: #{tpu_custom_call.1} parent=11 // pred_fallthru
          _
        // Predicated region
        $region21: #{tpu_custom_call.1} parent=11 // pred_check
          %p210 = pneg %p151
        $region22: #{tpu_custom_call.1} parent=11 // pred_check_branch
          %212 = sbr.rel (%p210) target = $region24
        $region23: #{tpu_custom_call.1} parent=11 // pred_region
          _
        $region24: #{tpu_custom_call.1} parent=11 // pred_fallthru
          _
      $region12: #{tpu_custom_call.1} parent=5 // pred_fallthru
        _
      %p213 = scmp.lt.s32.totalorder %s20, 2
      // Predicated region
      $region25: #{tpu_custom_call.1} parent=5 // pred_check
        %p214 = pneg %p213
      $region26: #{tpu_custom_call.1} parent=5 // pred_check_branch
        %216 = sbr.rel (%p214) target = $region28
      $region27: #{tpu_custom_call.1} parent=5 // pred_region
        // Predicated region
        $region29: #{tpu_custom_call.1} parent=27 // pred_check
          %p217 = pneg %p54
        $region30: #{tpu_custom_call.1} parent=27 // pred_check_branch
          %219 = sbr.rel (%p217) target = $region32
        $region31: #{tpu_custom_call.1} parent=27 // pred_region
          %s220 = sand.u32 %s44, 1
          %s221 = scalar_lea.sflag [#allocation3], %s220
          %s222 = sand.u32 %s44, 1
          %s223 = smul.addr %s222, 64
          %s224 = scalar_lea.vmem [#allocation2], %s223
          %s225 = smul.u32 2, %s28
          %s227 = ssub.s32 1024, 1024
          %228 = vsyncadd %s221, %s227
          %s229 = smul.addr %s27, 8
          %s230 = sadd.s32 %s225, %s229
          %s231 = smul.addr %s230, 128
          %s232 = scalar_lea.hbm %s0, %s231
          %s233 = sshll.u32 %s224, 4
          %s234 = int_to_ptr.vmem [resolvable:$true] %s233
          %239 = dma.hbm_to_vmem [thread:$0]  %s232, 1024, %s234, %s221, 256, 256, 16
        $region32: #{tpu_custom_call.1} parent=27 // pred_fallthru
          _
        // Predicated region
        $region33: #{tpu_custom_call.1} parent=27 // pred_check
          %p240 = pneg %p82
        $region34: #{tpu_custom_call.1} parent=27 // pred_check_branch
          %242 = sbr.rel (%p240) target = $region36
        $region35: #{tpu_custom_call.1} parent=27 // pred_region
          %s243 = sand.u32 %s20, 1
          %s244 = scalar_lea.sflag [#allocation6], %s243
          %s245 = sand.u32 %s72, 1
          %s246 = smul.addr %s245, 64
          %s247 = scalar_lea.vmem [#allocation5], %s246
          %s248 = smul.u32 2, %s28
          %s250 = ssub.s32 1024, 1024
          %251 = vsyncadd %s244, %s250
          %s252 = smul.addr %s27, 8
          %s253 = sadd.s32 %s248, %s252
          %s254 = smul.addr %s253, 128
          %s255 = scalar_lea.hbm %s1, %s254
          %s256 = sshll.u32 %s247, 4
          %s257 = int_to_ptr.vmem [resolvable:$true] %s256
          %262 = dma.hbm_to_vmem [thread:$0]  %s255, 1024, %s257, %s244, 256, 256, 16
        $region36: #{tpu_custom_call.1} parent=27 // pred_fallthru
          _
      $region28: #{tpu_custom_call.1} parent=5 // pred_fallthru
        _
      %p263 = scmp.le.s32.totalorder 1, %s20
      %p264 = scmp.lt.s32.totalorder %s20, 3
      %p265 = pnand %p263, %p264
      %p266 = pneg %p265
      // Predicated region
      $region37: #{tpu_custom_call.1} parent=5 // pred_check
        _
      $region38: #{tpu_custom_call.1} parent=5 // pred_check_branch
        %268 = sbr.rel (%p265) target = $region40
      $region39: #{tpu_custom_call.1} parent=5 // pred_region
        %s269 = ssub.s32 %s20, 1
        %s270 = sand.u32 %s47, 1
        %s271 = scalar_lea.sflag [#allocation3], %s270
        %s272 = sand.u32 %s47, 1
        %s273 = smul.addr %s272, 64
        %s274 = scalar_lea.vmem [#allocation2], %s273
        // Predicated region
        $region41: #{tpu_custom_call.1} parent=39 // pred_check
          %p275 = pneg %p60
        $region42: #{tpu_custom_call.1} parent=39 // pred_check_branch
          %277 = sbr.rel (%p275) target = $region44
        $region43: #{tpu_custom_call.1} parent=39 // pred_region
          %278 = dma.done %s271, 1024
        $region44: #{tpu_custom_call.1} parent=39 // pred_fallthru
          _
        %s279 = sand.u32 %s25, 1
        %s280 = scalar_lea.sflag [#allocation6], %s279
        %s281 = sand.u32 %s75, 1
        %s282 = smul.addr %s281, 64
        %s283 = scalar_lea.vmem [#allocation5], %s282
        // Predicated region
        $region45: #{tpu_custom_call.1} parent=39 // pred_check
          %p284 = pneg %p88
        $region46: #{tpu_custom_call.1} parent=39 // pred_check_branch
          %286 = sbr.rel (%p284) target = $region48
        $region47: #{tpu_custom_call.1} parent=39 // pred_region
          %287 = dma.done %s280, 1024
        $region48: #{tpu_custom_call.1} parent=39 // pred_fallthru
          _
        // Predicated region
        $region49: #{tpu_custom_call.1} parent=39 // pred_check
          %p288 = pneg %p130
        $region50: #{tpu_custom_call.1} parent=39 // pred_check_branch
          %290 = sbr.rel (%p288) target = $region52
        $region51: #{tpu_custom_call.1} parent=39 // pred_region
          %291 = dma.done [#allocation6], 512
        $region52: #{tpu_custom_call.1} parent=39 // pred_fallthru
          _
        %s292 = sand.u32 %s47, 1
        %s293 = scalar_lea.sflag [#allocation3], %s292
        %s294 = sand.u32 %s47, 1
        %s295 = smul.addr %s294, 64
        %s296 = scalar_lea.vmem [#allocation2], %s295
        %p297 = pneg %p60
        %p298 = pneg %p57
        %s299 = sand.u32 %s25, 1
        %s300 = scalar_lea.sflag [#allocation6], %s299
        %s301 = sand.u32 %s75, 1
        %s302 = smul.addr %s301, 64
        %s303 = scalar_lea.vmem [#allocation5], %s302
        %p304 = pneg %p88
        %p305 = pneg %p85
        %p306 = pneg %p109
        %p307 = pneg %p106
        %p308 = pneg %p130
        %p309 = pneg %p127
        %p310 = pneg %p151
        %p311 = pneg %p148
        %p312 = pneg %p179
        %p313 = pneg %p176
        %s314 = sand.u32 %s166, 1
        %s315 = scalar_lea.sflag [#allocation4], %s314
        %s316 = sand.u32 %s166, 1
        %s317 = smul.addr %s316, 64
        %s318 = scalar_lea.vmem [#allocation8], %s317
        %s319 = smul.u32 2, %s30
        %s320 = smul.u32 2, %s30
        %s321 = smul.u32 2, %s30
        %v322 = vld [vmem:[%s274] sm:$0xff]
        %v323 = vld [vmem:[%s274 + $0x8] sm:$0xff]
        %v324 = vld [vmem:[%s274 + $0x10] sm:$0xff]
        %v325 = vld [vmem:[%s274 + $0x18] sm:$0xff]
        %v326 = vld [vmem:[%s274 + $0x20] sm:$0xff]
        %v327 = vld [vmem:[%s274 + $0x28] sm:$0xff]
        %v328 = vld [vmem:[%s274 + $0x30] sm:$0xff]
        %v329 = vld [vmem:[%s274 + $0x38] sm:$0xff]
        %v330 = vld [vmem:[%s283] sm:$0xff]
        %v331 = vld [vmem:[%s283 + $0x8] sm:$0xff]
        %v332 = vld [vmem:[%s283 + $0x10] sm:$0xff]
        %v333 = vld [vmem:[%s283 + $0x18] sm:$0xff]
        %v334 = vld [vmem:[%s283 + $0x20] sm:$0xff]
        %v335 = vld [vmem:[%s283 + $0x28] sm:$0xff]
        %v336 = vld [vmem:[%s283 + $0x30] sm:$0xff]
        %v337 = vld [vmem:[%s283 + $0x38] sm:$0xff]
        %v338 = vld [vmem:[%s2] sm:$0xff]
        %v339 = vld [vmem:[%s2 + $0x8] sm:$0xff]
        %v340 = vld [vmem:[%s2 + $0x10] sm:$0xff]
        %v341 = vld [vmem:[%s2 + $0x18] sm:$0xff]
        %v342 = vld [vmem:[#allocation7] sm:$0xff]
        %v343 = vld [vmem:[#allocation7 + $0x8] sm:$0xff]
        %v344 = vld [vmem:[#allocation7 + $0x10] sm:$0xff]
        %v345 = vld [vmem:[#allocation7 + $0x18] sm:$0xff]
        %vm346 = vcmask 261120
        %v348 = vsel %vm346, %v342, 0
        %v351 = vsel %vm346, %v343, 0
        %v354 = vsel %vm346, %v344, 0
        %v357 = vsel %vm346, %v345, 0
        %359 = vmatprep.subr.mxu0 %v331
        %360 = vmatpush1.msra.mxu0 %v330
        %361 = vmatprep.subr.mxu0 %v333
        %362 = vmatpush1.msra.mxu0 %v332
        %363 = vmatprep.subr.mxu0 %v335
        %364 = vmatpush1.msra.mxu0 %v334
        %365 = vmatprep.subr.mxu0 %v337
        %366 = vmatpush1.msra.mxu0 %v336
        %367 = vmatprep.subr.mxu0 0.0
        %368 = vmatpush1.msra.mxu0 0.0
        %369 = vmatprep.subr.mxu0 0.0
        %370 = vmatpush1.msra.mxu0 0.0
        %371 = vmatprep.subr.mxu0 0.0
        %372 = vmatpush1.msra.mxu0 0.0
        %373 = vmatprep.subr.mxu0 0.0
        %374 = vmatpush1.msra.mxu0 0.0
        %375 = vmatprep.subr.mxu0 0.0
        %376 = vmatpush1.msra.mxu0 0.0
        %377 = vmatprep.subr.mxu0 0.0
        %378 = vmatpush1.msra.mxu0 0.0
        %379 = vmatprep.subr.mxu0 0.0
        %380 = vmatpush1.msra.mxu0 0.0
        %381 = vmatprep.subr.mxu0 0.0
        %382 = vmatpush1.msra.mxu0 0.0
        %383 = vmatprep.subr.mxu0 0.0
        %384 = vmatpush1.msra.mxu0 0.0
        %385 = vmatprep.subr.mxu0 0.0
        %386 = vmatpush1.msra.mxu0 0.0
        %387 = vmatprep.subr.mxu0 0.0
        %388 = vmatpush1.msra.mxu0 0.0
        %389 = vmatprep.subr.mxu0 0.0
        %390 = vmatpush1.msra.mxu0 0.0
        %391 = vmatprep.subr.mxu0 0.0
        %392 = vmatpush1.msra.mxu0 0.0
        %393 = vmatprep.subr.mxu0 0.0
        %394 = vmatpush1.msra.mxu0 0.0
        %395 = vmatprep.subr.mxu0 0.0
        %396 = vmatpush1.msra.mxu0 0.0
        %397 = vmatprep.subr.mxu0 0.0
        %398 = vmatpush1.msra.mxu0 0.0
        %399 = vmatprep.subr.mxu0 0.0
        %400 = vmatpush1.msra.mxu0 0.0
        %401 = vmatprep.subr.mxu0 0.0
        %402 = vmatpush1.msra.mxu0 0.0
        %403 = vmatprep.subr.mxu0 0.0
        %404 = vmatpush1.msra.mxu0 0.0
        %405 = vmatprep.subr.mxu0 0.0
        %406 = vmatpush1.msra.mxu0 0.0
        %407 = vmatprep.subr.mxu0 0.0
        %408 = vmatpush1.msra.mxu0 0.0
        %409 = vmatprep.subr.mxu0 0.0
        %410 = vmatpush1.msra.mxu0 0.0
        %411 = vmatprep.subr.mxu0 0.0
        %412 = vmatpush1.msra.mxu0 0.0
        %413 = vmatprep.subr.mxu0 0.0
        %414 = vmatpush1.msra.mxu0 0.0
        %415 = vmatprep.subr.mxu0 0.0
        %416 = vmatpush1.msra.mxu0 0.0
        %417 = vmatprep.subr.mxu0 0.0
        %418 = vmatpush1.msra.mxu0 0.0
        %419 = vmatprep.subr.mxu0 0.0
        %420 = vmatpush1.msra.mxu0 0.0
        %421 = vmatprep.subr.mxu0 0.0
        %422 = vmatpush1.msra.mxu0 0.0
        %423 = vmatprep.mubr.f32.mxu0 0.0
        %424 = vmatmul.mubr.f32.gmra.mrb[0].mxu0 %v348
        %v425 = vpop.f32.mrb[0].mxu0
        %v426 = vadd.f32 0.0, %v425
        %v427 = vpop.f32.mrb[0].mxu0
        %v428 = vadd.f32 0.0, %v427
        %429 = vmatprep.mubr.f32.mxu0 0.0
        %430 = vmatmul.mubr.f32.gmra.mrb[0].mxu0 %v351
        %v431 = vpop.f32.mrb[0].mxu0
        %v432 = vadd.f32 0.0, %v431
        %v433 = vpop.f32.mrb[0].mxu0
        %v434 = vadd.f32 0.0, %v433
        %435 = vmatprep.mubr.f32.mxu0 0.0
        %436 = vmatmul.mubr.f32.gmra.mrb[0].mxu0 %v354
        %v437 = vpop.f32.mrb[0].mxu0
        %v438 = vadd.f32 0.0, %v437
        %v439 = vpop.f32.mrb[0].mxu0
        %v440 = vadd.f32 0.0, %v439
        %441 = vmatprep.mubr.f32.mxu0 0.0
        %442 = vmatmul.mubr.f32.gmra.mrb[0].mxu0 %v357
        %v443 = vpop.f32.mrb[0].mxu0
        %v444 = vadd.f32 0.0, %v443
        %v445 = vpop.f32.mrb[0].mxu0
        %v446 = vadd.f32 0.0, %v445
        %447 = vdwg.mxu0
        %v449 = vsel %vm346, %v338, 0
        %v452 = vsel %vm346, %v339, 0
        %v455 = vsel %vm346, %v340, 0
        %v458 = vsel %vm346, %v341, 0
        %460 = vmatprep.subr.mxu0 %v323
        %461 = vmatpush1.msra.mxu0 %v322
        %462 = vmatprep.subr.mxu0 %v325
        %463 = vmatpush1.msra.mxu0 %v324
        %464 = vmatprep.subr.mxu0 %v327
        %465 = vmatpush1.msra.mxu0 %v326
        %466 = vmatprep.subr.mxu0 %v329
        %467 = vmatpush1.msra.mxu0 %v328
        %468 = vmatprep.subr.mxu0 0.0
        %469 = vmatpush1.msra.mxu0 0.0
        %470 = vmatprep.subr.mxu0 0.0
        %471 = vmatpush1.msra.mxu0 0.0
        %472 = vmatprep.subr.mxu0 0.0
        %473 = vmatpush1.msra.mxu0 0.0
        %474 = vmatprep.subr.mxu0 0.0
        %475 = vmatpush1.msra.mxu0 0.0
        %476 = vmatprep.subr.mxu0 0.0
        %477 = vmatpush1.msra.mxu0 0.0
        %478 = vmatprep.subr.mxu0 0.0
        %479 = vmatpush1.msra.mxu0 0.0
        %480 = vmatprep.subr.mxu0 0.0
        %481 = vmatpush1.msra.mxu0 0.0
        %482 = vmatprep.subr.mxu0 0.0
        %483 = vmatpush1.msra.mxu0 0.0
        %484 = vmatprep.subr.mxu0 0.0
        %485 = vmatpush1.msra.mxu0 0.0
        %486 = vmatprep.subr.mxu0 0.0
        %487 = vmatpush1.msra.mxu0 0.0
        %488 = vmatprep.subr.mxu0 0.0
        %489 = vmatpush1.msra.mxu0 0.0
        %490 = vmatprep.subr.mxu0 0.0
        %491 = vmatpush1.msra.mxu0 0.0
        %492 = vmatprep.subr.mxu0 0.0
        %493 = vmatpush1.msra.mxu0 0.0
        %494 = vmatprep.subr.mxu0 0.0
        %495 = vmatpush1.msra.mxu0 0.0
        %496 = vmatprep.subr.mxu0 0.0
        %497 = vmatpush1.msra.mxu0 0.0
        %498 = vmatprep.subr.mxu0 0.0
        %499 = vmatpush1.msra.mxu0 0.0
        %500 = vmatprep.subr.mxu0 0.0
        %501 = vmatpush1.msra.mxu0 0.0
        %502 = vmatprep.subr.mxu0 0.0
        %503 = vmatpush1.msra.mxu0 0.0
        %504 = vmatprep.subr.mxu0 0.0
        %505 = vmatpush1.msra.mxu0 0.0
        %506 = vmatprep.subr.mxu0 0.0
        %507 = vmatpush1.msra.mxu0 0.0
        %508 = vmatprep.subr.mxu0 0.0
        %509 = vmatpush1.msra.mxu0 0.0
        %510 = vmatprep.subr.mxu0 0.0
        %511 = vmatpush1.msra.mxu0 0.0
        %512 = vmatprep.subr.mxu0 0.0
        %513 = vmatpush1.msra.mxu0 0.0
        %514 = vmatprep.subr.mxu0 0.0
        %515 = vmatpush1.msra.mxu0 0.0
        %516 = vmatprep.subr.mxu0 0.0
        %517 = vmatpush1.msra.mxu0 0.0
        %518 = vmatprep.subr.mxu0 0.0
        %519 = vmatpush1.msra.mxu0 0.0
        %520 = vmatprep.subr.mxu0 0.0
        %521 = vmatpush1.msra.mxu0 0.0
        %522 = vmatprep.subr.mxu0 0.0
        %523 = vmatpush1.msra.mxu0 0.0
        %524 = vmatprep.mubr.f32.mxu0 0.0
        %525 = vmatmul.mubr.f32.gmra.mrb[0].mxu0 %v449
        %v526 = vpop.f32.mrb[0].mxu0
        %v527 = vadd.f32 %v426, %v526
        %v528 = vpop.f32.mrb[0].mxu0
        %v529 = vadd.f32 %v428, %v528
        %530 = vmatprep.mubr.f32.mxu0 0.0
        %531 = vmatmul.mubr.f32.gmra.mrb[0].mxu0 %v452
        %v532 = vpop.f32.mrb[0].mxu0
        %v533 = vadd.f32 %v432, %v532
        %v534 = vpop.f32.mrb[0].mxu0
        %v535 = vadd.f32 %v434, %v534
        %536 = vmatprep.mubr.f32.mxu0 0.0
        %537 = vmatmul.mubr.f32.gmra.mrb[0].mxu0 %v455
        %v538 = vpop.f32.mrb[0].mxu0
        %v539 = vadd.f32 %v438, %v538
        %v540 = vpop.f32.mrb[0].mxu0
        %v541 = vadd.f32 %v440, %v540
        %542 = vmatprep.mubr.f32.mxu0 0.0
        %543 = vmatmul.mubr.f32.gmra.mrb[0].mxu0 %v458
        %v544 = vpop.f32.mrb[0].mxu0
        %v545 = vadd.f32 %v444, %v544
        %v546 = vpop.f32.mrb[0].mxu0
        %v547 = vadd.f32 %v446, %v546
        %548 = vdwg.mxu0
        %v549 = vld [vmem:[%s4] sm:$0xff]
        %v550 = vld [vmem:[%s4 + $0x8] sm:$0xff]
        %v551 = vld [vmem:[%s4 + $0x10] sm:$0xff]
        %v552 = vld [vmem:[%s4 + $0x18] sm:$0xff]
        %554 = vset.pattern.permute.xlu0 0
        %555 = vperm.xlu0 %554, %v549
        %v556 = vpop.permute.xlu0 %555
        %559 = vset.pattern.permute.xlu0 0
        %560 = vperm.xlu0 %559, %v550
        %v561 = vpop.permute.xlu0 %560
        %564 = vset.pattern.permute.xlu0 0
        %565 = vperm.xlu0 %564, %v551
        %v566 = vpop.permute.xlu0 %565
        %569 = vset.pattern.permute.xlu0 0
        %570 = vperm.xlu0 %569, %v552
        %v571 = vpop.permute.xlu0 %570
        %v573 = vadd.f32 %v527, %v556
        %v574 = vadd.f32 %v529, %v556
        %v575 = vadd.f32 %v533, %v561
        %v576 = vadd.f32 %v535, %v561
        %v577 = vadd.f32 %v539, %v566
        %v578 = vadd.f32 %v541, %v566
        %v579 = vadd.f32 %v545, %v571
        %v580 = vadd.f32 %v547, %v571
        %v581 = vmul.f32 %v573, 0.5
        %v582 = vmul.f32 %v574, 0.5
        %v583 = vmul.f32 %v575, 0.5
        %v584 = vmul.f32 %v576, 0.5
        %v585 = vmul.f32 %v577, 0.5
        %v586 = vmul.f32 %v578, 0.5
        %v587 = vmul.f32 %v579, 0.5
        %v588 = vmul.f32 %v580, 0.5
        %v589 = vtanh.pop %v581
        %v590 = vtanh.pop %v582
        %v591 = vtanh.pop %v583
        %v592 = vtanh.pop %v584
        %v593 = vtanh.pop %v585
        %v594 = vtanh.pop %v586
        %v595 = vtanh.pop %v587
        %v596 = vtanh.pop %v588
        %v597 = vmul.f32 %v589, 0.5
        %v598 = vmul.f32 %v590, 0.5
        %v599 = vmul.f32 %v591, 0.5
        %v600 = vmul.f32 %v592, 0.5
        %v601 = vmul.f32 %v593, 0.5
        %v602 = vmul.f32 %v594, 0.5
        %v603 = vmul.f32 %v595, 0.5
        %v604 = vmul.f32 %v596, 0.5
        %v605 = vadd.f32 %v597, 0.5
        %v606 = vadd.f32 %v598, 0.5
        %v607 = vadd.f32 %v599, 0.5
        %v608 = vadd.f32 %v600, 0.5
        %v609 = vadd.f32 %v601, 0.5
        %v610 = vadd.f32 %v602, 0.5
        %v611 = vadd.f32 %v603, 0.5
        %v612 = vadd.f32 %v604, 0.5
        %v613 = vmul.f32 %v330, %v605
        %v614 = vmul.f32 %v331, %v606
        %v615 = vmul.f32 %v332, %v607
        %v616 = vmul.f32 %v333, %v608
        %v617 = vmul.f32 %v334, %v609
        %v618 = vmul.f32 %v335, %v610
        %v619 = vmul.f32 %v336, %v611
        %v620 = vmul.f32 %v337, %v612
        %v621 = vadd.f32 %v322, %v613
        %v622 = vadd.f32 %v323, %v614
        %v623 = vadd.f32 %v324, %v615
        %v624 = vadd.f32 %v325, %v616
        %v625 = vadd.f32 %v326, %v617
        %v626 = vadd.f32 %v327, %v618
        %v627 = vadd.f32 %v328, %v619
        %v628 = vadd.f32 %v329, %v620
        %629 = vst [vmem:[%s318] sm:$0xff] %v621
        %630 = vst [vmem:[%s318 + $0x8] sm:$0xff] %v622
        %631 = vst [vmem:[%s318 + $0x10] sm:$0xff] %v623
        %632 = vst [vmem:[%s318 + $0x18] sm:$0xff] %v624
        %633 = vst [vmem:[%s318 + $0x20] sm:$0xff] %v625
        %634 = vst [vmem:[%s318 + $0x28] sm:$0xff] %v626
        %635 = vst [vmem:[%s318 + $0x30] sm:$0xff] %v627
        %636 = vst [vmem:[%s318 + $0x38] sm:$0xff] %v628
        %s637 = sand.u32 %s166, 1
        %s638 = scalar_lea.sflag [#allocation4], %s637
        %s639 = sand.u32 %s166, 1
        %s640 = smul.addr %s639, 64
        %s641 = scalar_lea.vmem [#allocation8], %s640
        // Predicated region
        $region53: #{tpu_custom_call.1} parent=39 // pred_check
          %p642 = pneg %p176
        $region54: #{tpu_custom_call.1} parent=39 // pred_check_branch
          %644 = sbr.rel (%p642) target = $region56
        $region55: #{tpu_custom_call.1} parent=39 // pred_region
          %s645 = smul.u32 2, %s30
          %s647 = ssub.s32 1024, 1024
          %648 = vsyncadd %s638, %s647
          %s649 = smul.addr %s29, 8
          %s650 = sadd.s32 %s645, %s649
          %s651 = smul.addr %s650, 128
          %s652 = scalar_lea.hbm %s5, %s651
          %s653 = sshll.u32 %s641, 4
          %s654 = int_to_ptr.vmem [resolvable:$true] %s653
          %659 = dma.vmem_to_hbm [thread:$0]  %s654, 1024, %s652, %s638, 256, 256, 16
        $region56: #{tpu_custom_call.1} parent=39 // pred_fallthru
          _
      $region40: #{tpu_custom_call.1} parent=5 // pred_fallthru
        _
      %p660 = scmp.le.s32.totalorder 2, %s20
      // Predicated region
      $region57: #{tpu_custom_call.1} parent=5 // pred_check
        %p661 = pneg %p660
      $region58: #{tpu_custom_call.1} parent=5 // pred_check_branch
        %663 = sbr.rel (%p661) target = $region60
      $region59: #{tpu_custom_call.1} parent=5 // pred_region
        %s664 = ssub.s32 %s20, 2
        // Predicated region
        $region61: #{tpu_custom_call.1} parent=59 // pred_check
          %p665 = pneg %p182
        $region62: #{tpu_custom_call.1} parent=59 // pred_check_branch
          %667 = sbr.rel (%p665) target = $region64
        $region63: #{tpu_custom_call.1} parent=59 // pred_region
          %s668 = sand.u32 %s167, 1
          %s669 = scalar_lea.sflag [#allocation4], %s668
          %s670 = sand.u32 %s167, 1
          %s671 = smul.addr %s670, 64
          %s672 = scalar_lea.vmem [#allocation8], %s671
          %673 = dma.done %s669, 1024
        $region64: #{tpu_custom_call.1} parent=59 // pred_fallthru
          _
      $region60: #{tpu_custom_call.1} parent=5 // pred_fallthru
        _
    $region6: #{tpu_custom_call.1} parent=1 // loop_footer
      %s24 = sadd.s32 1, %s20
    $region7: #{tpu_custom_call.1} parent=1 // loop_footer_branch
      %19 = sbr.rel target = $region3
    $region8: #{tpu_custom_call.1} parent=1 // loop_exit
      _
    %674 = vsyncpa [#allocation3], 1
    %s675 = scalar_lea.sflag [#allocation3], 1
    %676 = vsyncpa %s675, 1
    %677 = vsyncpa [#allocation6], 1
    %s678 = scalar_lea.sflag [#allocation6], 1
    %679 = vsyncpa %s678, 1
    %680 = vsyncpa [#allocation4], 1
    %s681 = scalar_lea.sflag [#allocation4], 1
    %682 = vsyncpa %s681, 1

</llo_original>
